<compile_context>
chip_gen: v7x
topology: tpu7x:2x2x1
jax: 0.10.0
libtpu: 0.0.40
codegen_flags: <defaults>
</compile_context>

<pallas_src>
import jax
import jax.numpy as jnp
from jax.experimental import pallas as pl
from jax.experimental.pallas import tpu as pltpu


def _add_broadcast_kernel(t_ref, d_ref, o_ref):
    # t_ref / d_ref: (1, ND) lane-dense rows (constant block index -> fetched once).
    # o_ref: (TB, ND) output block -> sublane-broadcast the summed row.
    row = t_ref[...] + d_ref[...]
    o_ref[...] = jnp.broadcast_to(row, o_ref.shape)


def _choose_tb(batch_size: int, nd: int, itemsize: int,
               target_bytes: int = 1 << 20) -> int:
    """Rows per output block: ~1 MiB per block, BlockSpec-legal (mult of 8 or full axis)."""
    tb = max(1, target_bytes // max(1, nd * itemsize))
    if tb >= batch_size:
        return batch_size                       # block == full axis -> always legal
    tb = max(8, (tb // 8) * 8)                  # sublane rule: multiple of 8
    return min(tb, batch_size)


def model_forward(template_params: jax.Array,
                  displace: jax.Array,
                  batch_size: int) -> jax.Array:
    """Equivalent of Model.forward(): (template_params + displace).repeat(batch_size, 1)."""
    assert template_params.ndim == 2, "expects 2-D template params [N, D]"
    assert template_params.shape == displace.shape
    N, D = template_params.shape
    nd = N * D
    dtype = template_params.dtype
    itemsize = jnp.dtype(dtype).itemsize

    # Lane-dense flat views (free row-major reshapes).
    t_flat = template_params.reshape(1, nd)
    d_flat = displace.reshape(1, nd)

    tb = _choose_tb(batch_size, nd, itemsize)
    num_blocks = pl.cdiv(batch_size, tb)

    out2d = pl.pallas_call(
        _add_broadcast_kernel,
        out_shape=jax.ShapeDtypeStruct((batch_size, nd), dtype),
        grid=(num_blocks,),
        in_specs=[
            # Same full (1, ND) row every step (constant block index -> no re-DMA).
            pl.BlockSpec((1, nd), lambda b: (0, 0)),
            pl.BlockSpec((1, nd), lambda b: (0, 0)),
        ],
        # TB batch rows per step -> large contiguous, unmasked writeback.
        out_specs=pl.BlockSpec((tb, nd), lambda b: (b, 0)),
        compiler_params=pltpu.CompilerParams(
            dimension_semantics=("parallel",),
        ),
    )(t_flat, d_flat)

    # Free reshape back to the torch layout (batch_size * N, D).
    return out2d.reshape(batch_size * N, D)


if __name__ == "__main__":
    # Deterministic small setup consistent with the module:
    #   template_params: [N, D] buffer; displace: parameter init'd to zeros_like.
    batch_size = 2
    N, D = 64, 3

    key = jax.random.PRNGKey(0)
    template_params = jax.random.normal(key, (N, D), dtype=jnp.float32)
    displace = jnp.zeros_like(template_params)  # matches nn.Parameter(zeros_like(...))

    out = model_forward(template_params, displace, batch_size)
    out = jax.block_until_ready(out)

    # Pure-JAX reference for the forward semantics.
    ref = jnp.tile(template_params + displace, (batch_size, 1))
    assert out.shape == (batch_size * N, D), out.shape
    assert jnp.allclose(out, ref), "mismatch vs reference"

    print("KERNEL_OK")
</pallas_src>

<mosaic_0001>
module attributes {stable_mosaic.version = 11 : i64} {
  func.func @_add_broadcast_kernel(%arg0: i32, %arg1: memref<1x192xf32, #tpu.memory_space<vmem>>, %arg2: memref<1x192xf32, #tpu.memory_space<vmem>>, %arg3: memref<2x192xf32, #tpu.memory_space<vmem>>) attributes {dimension_semantics = [#tpu.dimension_semantics<parallel>], iteration_bounds = array<i64: 1>, scalar_prefetch = 0 : i64, scratch_operands = 0 : i64, tpu.core_type = #tpu.core_type<tc>, window_params = [{pipeline_mode = #tpu.pipeline_mode<synchronous>, transform_indices = @transform_0, window_bounds = array<i64: 1, 192>}, {pipeline_mode = #tpu.pipeline_mode<synchronous>, transform_indices = @transform_1, window_bounds = array<i64: 1, 192>}, {transform_indices = @transform_2, window_bounds = array<i64: 2, 192>}]} {
    %c0 = arith.constant 0 : index
    %c0_0 = arith.constant 0 : index
    %0 = vector.load %arg1[%c0, %c0_0] : memref<1x192xf32, #tpu.memory_space<vmem>>, vector<1x192xf32>
    %c0_1 = arith.constant 0 : index
    %c0_2 = arith.constant 0 : index
    %1 = vector.load %arg2[%c0_1, %c0_2] : memref<1x192xf32, #tpu.memory_space<vmem>>, vector<1x192xf32>
    %2 = arith.addf %0, %1 : vector<1x192xf32>
    %3 = vector.shape_cast %2 : vector<1x192xf32> to vector<1x192xf32>
    %4 = vector.broadcast %3 : vector<1x192xf32> to vector<2x192xf32>
    %c0_3 = arith.constant 0 : index
    %c0_4 = arith.constant 0 : index
    %5 = vector.load %arg3[%c0_3, %c0_4] : memref<2x192xf32, #tpu.memory_space<vmem>>, vector<2x192xf32>
    tpu.vector_store %arg3[%c0_3, %c0_4], %4 {strides = array<i32>} : memref<2x192xf32, #tpu.memory_space<vmem>>, vector<2x192xf32>,
    return
  }
  func.func @transform_0(%arg0: i32) -> (i32, i32) {
    %c0_i32 = arith.constant 0 : i32
    %c0_i32_0 = arith.constant 0 : i32
    %c0_i32_1 = arith.constant 0 : i32
    return %c0_i32, %c0_i32_0 : i32, i32
  }
  func.func @transform_1(%arg0: i32) -> (i32, i32) {
    %c0_i32 = arith.constant 0 : i32
    %c0_i32_0 = arith.constant 0 : i32
    %c0_i32_1 = arith.constant 0 : i32
    return %c0_i32, %c0_i32_0 : i32, i32
  }
  func.func @transform_2(%arg0: i32) -> (i32, i32) {
    %c0_i32 = arith.constant 0 : i32
    %c0_i32_0 = arith.constant 0 : i32
    return %arg0, %c0_i32 : i32, i32
  }
}

</mosaic_0001>

<llo_original>
// kernel: tpu_custom_call.1
$region0: #{tpu_custom_call.1}
  #allocation0 [shape = 'u32[]', space=smem, size = 0x4, offset = 0x4, fixed_abs, tag = 'smem constant byte address 0x4 - core index']
  #allocation1 [shape = 'u32[144,128]{1,0:T(1,128)}', space=vmem, size = 0x12000, scoped, tag = 'internal scratch']
  %s0 = inlined_call_operand.hbm [shape: f32[1,192], index: 0, kind: input, shape index: {}]
  %s1 = inlined_call_operand.vmem [shape: f32[1,192], index: 1, kind: input, shape index: {}]
  %s2 = inlined_call_operand.hbm [shape: f32[2,192], index: 2, kind: output, shape index: {}]
  %s3 = sld [smem:[#allocation0]]
  $region22: #{tpu_custom_call.1} parent=0
    _
  %s5 = ssub.s32 1, %s3
  %s6 = scalar_select 0, %s5, %s3
  $region1: #{tpu_custom_call.1} parent=0
    #allocation2 [shape = 'u8[1024]{0}', space=vmem, size = 0x400, scoped, tag = 'input window, operand 0, single buffered']
    #allocation3 [shape = 's32[1]{0}', space=sflag, size = 0x4, scoped, tag = 'scoped memory for tpu_custom_call.1']
    #allocation4 [shape = 's32[1]{0}', space=sflag, size = 0x4, scoped, tag = 'scoped memory for tpu_custom_call.1']
    #allocation5 [shape = 'u8[2048]{0}', space=vmem, size = 0x800, scoped, tag = 'output window, operand 0, single buffered']
    %7 = vsyncpa [#allocation3], 0
    %8 = vsyncpa [#allocation4], 0
    // Predicated region
    $region2: #{tpu_custom_call.1} parent=1 // pred_check
      _
    $region3: #{tpu_custom_call.1} parent=1 // pred_check_branch
      %10 = sbr.rel (0) target = $region5
    $region4: #{tpu_custom_call.1} parent=1 // pred_region
      %s12 = ssub.s32 32, 32
      %13 = vsyncadd [#allocation3], %s12
      %s15 = sshll.u32 [#allocation2], 4
      %s16 = int_to_ptr.vmem [resolvable:$true] %s15
      %18 = dma.hbm_to_vmem [thread:$0]  %s0, 32, %s16, [#allocation3]
    $region5: #{tpu_custom_call.1} parent=1 // pred_fallthru
      _
    // Predicated region
    $region6: #{tpu_custom_call.1} parent=1 // pred_check
      _
    $region7: #{tpu_custom_call.1} parent=1 // pred_check_branch
      %20 = sbr.rel (0) target = $region9
    $region8: #{tpu_custom_call.1} parent=1 // pred_region
      _
    $region9: #{tpu_custom_call.1} parent=1 // pred_fallthru
      _
    // Predicated region
    $region10: #{tpu_custom_call.1} parent=1 // pred_check
      _
    $region11: #{tpu_custom_call.1} parent=1 // pred_check_branch
      %22 = sbr.rel (0) target = $region13
    $region12: #{tpu_custom_call.1} parent=1 // pred_region
      %23 = dma.done [#allocation3], 32
    $region13: #{tpu_custom_call.1} parent=1 // pred_fallthru
      _
    %v24 = vld [vmem:[#allocation2] sm:$0x3]
    %v25 = vld [vmem:[%s1] sm:$0x3]
    %v26 = vadd.f32 %v24, %v25
    %v28 = vlaneseq
    %v29 = vshrl.u32 %v28, 7
    %v30 = vsub.s32 0, %v29
    %v31 = vrot.slane %v26, %v30
    %v32 = vlaneseq
    %v33 = vshrl.u32 %v32, 7
    %v34 = vsub.s32 1, %v33
    %v35 = vrot.slane %v26, %v34
    %v36 = vcombine.low %v31, %v35
    %v38 = vunpack.c.l.s4 1983009808
    %v39 = vunpack.c.0.s8 %v38
    %v40 = vlaneseq
    %v41 = vshrl.u32 %v40, 7
    %v42 = vsub.s32 %v39, %v41
    %v43 = vrot.slane %v36, %v42
    %vm45 = vcmask 1041408
    %vm46 = vcmask 519170
    %vm47 = vmor %vm46, %vm45
    %48 = vst.msk [vmem:[#allocation5] sm:$0xf] %vm47, %v43
    // Predicated region
    $region14: #{tpu_custom_call.1} parent=1 // pred_check
      _
    $region15: #{tpu_custom_call.1} parent=1 // pred_check_branch
      %50 = sbr.rel (0) target = $region17
    $region16: #{tpu_custom_call.1} parent=1 // pred_region
      %s52 = ssub.s32 64, 64
      %53 = vsyncadd [#allocation4], %s52
      %s55 = sshll.u32 [#allocation5], 4
      %s56 = int_to_ptr.vmem [resolvable:$true] %s55
      %58 = dma.vmem_to_hbm [thread:$0]  %s56, 64, %s2, [#allocation4]
    $region17: #{tpu_custom_call.1} parent=1 // pred_fallthru
      _
    // Predicated region
    $region18: #{tpu_custom_call.1} parent=1 // pred_check
      _
    $region19: #{tpu_custom_call.1} parent=1 // pred_check_branch
      %60 = sbr.rel (0) target = $region21
    $region20: #{tpu_custom_call.1} parent=1 // pred_region
      %61 = dma.done [#allocation4], 64
    $region21: #{tpu_custom_call.1} parent=1 // pred_fallthru
      _
    %62 = vsyncpa [#allocation3], 1
    %63 = vsyncpa [#allocation4], 1

</llo_original>
